<compile_context>
chip_gen: v6e
topology: v6e:2x2x1
jax: 0.10.0
libtpu: 0.0.40
codegen_flags: <defaults>
</compile_context>

<pallas_src>
import functools
import math

import jax
import jax.numpy as jnp
from jax.experimental import pallas as pl
from jax.experimental.pallas import tpu as pltpu

MAX_BLOCK_M = 256            # GEMM row tile
EW_BLOCK_ROWS = 256          # elementwise / reduction row tile
VMEM_LIMIT = 48 * 1024 * 1024  # fits v7x (64 MiB physical), above v5e's 16 MiB default
BN_EPS = 1e-5


def _block_rows(m, cap):
    # One full-array block when it fits (always legal), else an 8/16-aligned tile.
    return m if m <= cap else cap


# ----------------------------------------------------------------------------
# GEMM + bias, with fused per-channel sum / sum-of-squares of the output
# ----------------------------------------------------------------------------
def _matmul_bias_stats_kernel(a_ref, w_ref, b_ref, o_ref, st_ref, *, m_total, block_m):
    y = jnp.dot(a_ref[...], w_ref[...], preferred_element_type=jnp.float32)
    y = y + b_ref[...]
    o_ref[...] = y.astype(o_ref.dtype)
    # Mask rows of the (possibly partial) last M block before reducing stats.
    if m_total % block_m != 0:
        rows = jax.lax.broadcasted_iota(jnp.int32, (block_m, 1), 0)
        rows = rows + pl.program_id(0) * block_m
        y = jnp.where(rows < m_total, y, 0.0)
    s = jnp.sum(y, axis=0, keepdims=True)
    ss = jnp.sum(y * y, axis=0, keepdims=True)
    st_ref[...] = jnp.concatenate([s, ss], axis=0)[None]


def matmul_bias_stats(a, w, bias, out_dtype=jnp.bfloat16):
    """a:(M,K)->bf16, w:(K,N) bf16, bias:(1,N) f32. Returns (y, (mean, var))."""
    a = a.astype(jnp.bfloat16)
    M, K = a.shape
    _, N = w.shape
    bm = _block_rows(M, MAX_BLOCK_M)
    nb = pl.cdiv(M, bm)
    kernel = functools.partial(_matmul_bias_stats_kernel, m_total=M, block_m=bm)
    y, st = pl.pallas_call(
        kernel,
        out_shape=[jax.ShapeDtypeStruct((M, N), out_dtype),
                   jax.ShapeDtypeStruct((nb, 2, N), jnp.float32)],
        grid_spec=pltpu.PrefetchScalarGridSpec(
            num_scalar_prefetch=0,
            grid=(nb,),
            in_specs=[
                pl.BlockSpec((bm, K), lambda i: (i, 0)),    # activations: stream M
                pl.BlockSpec((K, N), lambda i: (0, 0)),     # weights: VMEM resident
                pl.BlockSpec((1, N), lambda i: (0, 0)),     # bias: VMEM resident
            ],
            out_specs=[
                pl.BlockSpec((bm, N), lambda i: (i, 0)),
                pl.BlockSpec((1, 2, N), lambda i: (i, 0, 0)),
            ],
        ),
        compiler_params=pltpu.CompilerParams(
            dimension_semantics=("parallel",),
            vmem_limit_bytes=VMEM_LIMIT),
        cost_estimate=pl.CostEstimate(
            flops=2 * M * K * N,
            transcendentals=0,
            bytes_accessed=2 * (M * K + K * N + M * N)),
    )(a, w, bias)
    s = jnp.sum(st[:, 0, :], axis=0)
    ss = jnp.sum(st[:, 1, :], axis=0)
    mean = s / M
    var = jnp.maximum(ss / M - mean * mean, 0.0)   # biased (train-mode) variance
    return y, (mean, var)


# ----------------------------------------------------------------------------
# BatchNorm(train stats) + ReLU  (two-pass), residual add, attention combine
# ----------------------------------------------------------------------------
def _stats_kernel(x_ref, st_ref, *, m_total, block_m):
    x = x_ref[...].astype(jnp.float32)
    if m_total % block_m != 0:
        rows = jax.lax.broadcasted_iota(jnp.int32, (block_m, 1), 0)
        rows = rows + pl.program_id(0) * block_m
        x = jnp.where(rows < m_total, x, 0.0)
    s = jnp.sum(x, axis=0, keepdims=True)
    ss = jnp.sum(x * x, axis=0, keepdims=True)
    st_ref[...] = jnp.concatenate([s, ss], axis=0)[None]


def channel_stats(x):
    """Per-channel mean / biased var over (B,H,W), like train-mode BatchNorm2d."""
    c = x.shape[-1]
    x2 = x.reshape(-1, c)
    m = x2.shape[0]
    bm = _block_rows(m, EW_BLOCK_ROWS)
    nb = pl.cdiv(m, bm)
    kernel = functools.partial(_stats_kernel, m_total=m, block_m=bm)
    st = pl.pallas_call(
        kernel,
        out_shape=jax.ShapeDtypeStruct((nb, 2, c), jnp.float32),
        grid_spec=pltpu.PrefetchScalarGridSpec(
            num_scalar_prefetch=0, grid=(nb,),
            in_specs=[pl.BlockSpec((bm, c), lambda i: (i, 0))],
            out_specs=pl.BlockSpec((1, 2, c), lambda i: (i, 0, 0))),
        compiler_params=pltpu.CompilerParams(
            dimension_semantics=("parallel",), vmem_limit_bytes=VMEM_LIMIT),
    )(x2)
    s = jnp.sum(st[:, 0, :], axis=0)
    ss = jnp.sum(st[:, 1, :], axis=0)
    mean = s / m
    var = jnp.maximum(ss / m - mean * mean, 0.0)
    return mean, var


def _bn_relu_kernel(x_ref, mv_ref, o_ref):
    # gamma=1 / beta=0 (fresh PyTorch init), eps=1e-5, followed by ReLU.
    x = x_ref[...].astype(jnp.float32)
    y = (x - mv_ref[0:1, :]) * jax.lax.rsqrt(mv_ref[1:2, :] + BN_EPS)
    o_ref[...] = jnp.maximum(y, 0.0).astype(o_ref.dtype)


def bn_relu_apply(x, mean, var):
    shape = x.shape
    c = shape[-1]
    x2 = x.reshape(-1, c)
    m = x2.shape[0]
    bm = _block_rows(m, EW_BLOCK_ROWS)
    nb = pl.cdiv(m, bm)
    mv = jnp.concatenate([mean.reshape(1, c), var.reshape(1, c)],
                         axis=0).astype(jnp.float32)
    out = pl.pallas_call(
        _bn_relu_kernel,
        out_shape=jax.ShapeDtypeStruct((m, c), x.dtype),
        grid_spec=pltpu.PrefetchScalarGridSpec(
            num_scalar_prefetch=0, grid=(nb,),
            in_specs=[pl.BlockSpec((bm, c), lambda i: (i, 0)),
                      pl.BlockSpec((2, c), lambda i: (0, 0))],
            out_specs=pl.BlockSpec((bm, c), lambda i: (i, 0))),
        compiler_params=pltpu.CompilerParams(
            dimension_semantics=("parallel",), vmem_limit_bytes=VMEM_LIMIT),
    )(x2, mv)
    return out.reshape(shape)


def bn_relu(x):
    mean, var = channel_stats(x)
    return bn_relu_apply(x, mean, var)


def _add_kernel(a_ref, b_ref, o_ref):
    o_ref[...] = a_ref[...] + b_ref[...]


def _combine_kernel(s_ref, t_ref, o_ref):
    # (1 + sigmoid(mask)) * trunk, sigmoid fused here.
    s = s_ref[...].astype(jnp.float32)
    t = t_ref[...].astype(jnp.float32)
    o_ref[...] = ((1.0 + jax.nn.sigmoid(s)) * t).astype(o_ref.dtype)


def _lane_dense_width(total, c):
    for d in (2048, 1024, 512, 256, 128):
        if total % d == 0:
            return d
    return c


def _ew2(kernel, a, b):
    shape = a.shape
    d = _lane_dense_width(a.size, shape[-1])      # lane-dense view: unmasked stores
    a2 = a.reshape(-1, d)
    b2 = b.reshape(-1, d)
    m = a2.shape[0]
    bm = _block_rows(m, EW_BLOCK_ROWS)
    nb = pl.cdiv(m, bm)
    out = pl.pallas_call(
        kernel,
        out_shape=jax.ShapeDtypeStruct((m, d), a.dtype),
        grid_spec=pltpu.PrefetchScalarGridSpec(
            num_scalar_prefetch=0, grid=(nb,),
            in_specs=[pl.BlockSpec((bm, d), lambda i: (i, 0)),
                      pl.BlockSpec((bm, d), lambda i: (i, 0))],
            out_specs=pl.BlockSpec((bm, d), lambda i: (i, 0))),
        compiler_params=pltpu.CompilerParams(
            dimension_semantics=("parallel",), vmem_limit_bytes=VMEM_LIMIT),
    )(a2, b2)
    return out.reshape(shape)


def residual_add(a, b):
    return _ew2(_add_kernel, a, b)


def attn_combine(mask_pre_sigmoid, trunk):
    return _ew2(_combine_kernel, mask_pre_sigmoid, trunk)


# ----------------------------------------------------------------------------
# Conv / pooling / interpolation glue (im2col in JAX, GEMM in Pallas)
# ----------------------------------------------------------------------------
def conv2d(x, p, stride=1, padding=0):
    """x:(B,H,W,Cin) bf16 NHWC. Returns (y, (mean, var)) with stats of y fused
    into the GEMM epilogue (used by a following BatchNorm, else ignored)."""
    B, H, W, Cin = x.shape
    kh, kw, Cout = p["kh"], p["kw"], p["cout"]
    if padding:
        x = jnp.pad(x, ((0, 0), (padding, padding), (padding, padding), (0, 0)))
    Hp, Wp = x.shape[1], x.shape[2]
    Ho = (Hp - kh) // stride + 1
    Wo = (Wp - kw) // stride + 1
    if kh == 1 and kw == 1:
        if stride != 1:
            x = x[:, ::stride, ::stride, :]
        cols = x.reshape(B * Ho * Wo, Cin)
    else:
        pats = [x[:, ki:ki + (Ho - 1) * stride + 1:stride,
                  kj:kj + (Wo - 1) * stride + 1:stride, :]
                for ki in range(kh) for kj in range(kw)]
        cols = jnp.concatenate(pats, axis=-1).reshape(B * Ho * Wo, kh * kw * Cin)
    y, stats = matmul_bias_stats(cols, p["wmat"], p["bias"], out_dtype=jnp.bfloat16)
    return y.reshape(B, Ho, Wo, Cout), stats


def max_pool_3x3_s2_p1(x):
    # F.max_pool2d(kernel=3, stride=2, padding=1)  (NHWC)
    init = jnp.asarray(-jnp.inf, dtype=x.dtype)
    return jax.lax.reduce_window(
        x, init, jax.lax.max,
        window_dimensions=(1, 3, 3, 1),
        window_strides=(1, 2, 2, 1),
        padding=((0, 0), (1, 1), (1, 1), (0, 0)))


def interpolate_nearest(x, size):
    # F.interpolate(mode='nearest'): src = floor(dst * in/out)
    B, H, W, C = x.shape
    Ho, Wo = size
    if (Ho, Wo) == (H, W):
        return x
    hi = jnp.floor(jnp.arange(Ho) * (H / Ho)).astype(jnp.int32)
    wi = jnp.floor(jnp.arange(Wo) * (W / Wo)).astype(jnp.int32)
    return x[:, hi][:, :, wi]


# ----------------------------------------------------------------------------
# Deterministic parameter construction (mirrors nn.Module __init__ shapes).
# Weights are pre-reshaped to GEMM layout and cast to bf16 once, here.
# ----------------------------------------------------------------------------
def conv_params(key, cout, cin, kh, kw):
    k_w, k_b = jax.random.split(key)
    bound = 1.0 / math.sqrt(cin * kh * kw)
    w = jax.random.uniform(k_w, (cout, cin, kh, kw), jnp.float32, -bound, bound)
    b = jax.random.uniform(k_b, (cout,), jnp.float32, -bound, bound)
    if kh == 1 and kw == 1:
        wmat = w.reshape(cout, cin).T
    else:
        wmat = jnp.transpose(w, (2, 3, 1, 0)).reshape(kh * kw * cin, cout)
    return {"wmat": wmat.astype(jnp.bfloat16),
            "bias": b.reshape(1, cout).astype(jnp.float32),
            "kh": kh, "kw": kw, "cout": cout}


def linear_params(key, out_f, in_f):
    k_w, k_b = jax.random.split(key)
    bound = 1.0 / math.sqrt(in_f)
    w = jax.random.uniform(k_w, (out_f, in_f), jnp.float32, -bound, bound)
    b = jax.random.uniform(k_b, (out_f,), jnp.float32, -bound, bound)
    return {"wmat": w.T.astype(jnp.bfloat16),
            "bias": b.reshape(1, out_f).astype(jnp.float32)}


def make_preact_unit(key, cin, cout, stride):
    bott = cout // 4
    k1, k2, k3, k4 = jax.random.split(key, 4)
    p = {"conv1": conv_params(k1, bott, cin, 1, 1),
         "conv2": conv_params(k2, bott, bott, 3, 3),
         "conv3": conv_params(k3, cout, bott, 1, 1),
         "stride": stride}
    # NOTE: mirrors the (unusual) PyTorch condition `stride != 2 or cin != cout`.
    if stride != 2 or cin != cout:
        p["shortcut"] = conv_params(k4, cout, cin, 1, 1)
    return p


def preact_unit_fwd(p, x):
    r = bn_relu(x)                                     # stats kernel (non-conv input)
    r, st = conv2d(r, p["conv1"], stride=p["stride"])
    r = bn_relu_apply(r, *st)                          # stats fused into GEMM
    r, st = conv2d(r, p["conv2"], stride=1, padding=1)
    r = bn_relu_apply(r, *st)                          # stats fused into GEMM
    r, _ = conv2d(r, p["conv3"])
    if "shortcut" in p:
        sc, _ = conv2d(x, p["shortcut"], stride=p["stride"])
    else:
        sc = x
    return residual_add(r, sc)


def seq(units, x):
    for u in units:
        x = preact_unit_fwd(u, x)
    return x


def make_attention_module(key, C, variant):
    keys = iter(jax.random.split(key, 32))
    p = {"variant": variant}
    p["pre"] = [make_preact_unit(next(keys), C, C, 1)]
    p["trunk"] = [make_preact_unit(next(keys), C, C, 1) for _ in range(2)]
    n_down = {1: 4, 2: 3, 3: 2}[variant]
    p["down"] = [[make_preact_unit(next(keys), C, C, 1)] for _ in range(n_down)]
    p["up"] = [[make_preact_unit(next(keys), C, C, 1)] for _ in range(n_down)]
    if variant == 1:
        p["shortcut_long"] = make_preact_unit(next(keys), C, C, 1)
    elif variant == 2:
        p["shortcut"] = make_preact_unit(next(keys), C, C, 1)
    p["sig_conv1"] = conv_params(next(keys), C, C, 1, 1)
    p["sig_conv2"] = conv_params(next(keys), C, C, 1, 1)
    p["last"] = [make_preact_unit(next(keys), C, C, 1)]
    return p


def attention_module_fwd(p, x):
    variant = p["variant"]
    x = seq(p["pre"], x)
    input_size = (x.shape[1], x.shape[2])
    x_t = seq(p["trunk"], x)

    if variant == 1:
        x_s = max_pool_3x3_s2_p1(x)
        x_s = seq(p["down"][0], x_s)
        shape1 = (x_s.shape[1], x_s.shape[2])
        shortcut_long = preact_unit_fwd(p["shortcut_long"], x_s)

        x_s = max_pool_3x3_s2_p1(x)
        x_s = seq(p["down"][1], x_s)
        shape2 = (x_s.shape[1], x_s.shape[2])
        shortcut_short = seq(p["down"][2], x_s)        # weight-shared soft_resdown3

        x_s = max_pool_3x3_s2_p1(x)
        x_s = seq(p["down"][2], x_s)
        x_s = seq(p["down"][3], x_s)
        x_s = seq(p["up"][0], x_s)
        x_s = seq(p["up"][1], x_s)
        x_s = interpolate_nearest(x_s, shape2)
        x_s = residual_add(x_s, shortcut_short)
        x_s = seq(p["up"][2], x_s)
        x_s = interpolate_nearest(x_s, shape1)
        x_s = residual_add(x_s, shortcut_long)
        x_s = seq(p["up"][3], x_s)
        x_s = interpolate_nearest(x_s, input_size)
    elif variant == 2:
        x_s = max_pool_3x3_s2_p1(x)
        x_s = seq(p["down"][0], x_s)
        shape1 = (x_s.shape[1], x_s.shape[2])
        shortcut = preact_unit_fwd(p["shortcut"], x_s)

        x_s = max_pool_3x3_s2_p1(x)
        x_s = seq(p["down"][1], x_s)
        x_s = seq(p["down"][2], x_s)
        x_s = seq(p["up"][0], x_s)
        x_s = seq(p["up"][1], x_s)
        x_s = interpolate_nearest(x_s, shape1)
        x_s = residual_add(x_s, shortcut)
        x_s = seq(p["up"][2], x_s)
        x_s = interpolate_nearest(x_s, input_size)
    else:  # variant 3
        x_s = max_pool_3x3_s2_p1(x)
        x_s = seq(p["down"][0], x_s)
        x_s = seq(p["down"][1], x_s)
        x_s = seq(p["up"][0], x_s)
        x_s = seq(p["up"][1], x_s)
        x_s = interpolate_nearest(x_s, input_size)

    # sigmoid branch: BN,ReLU,1x1,BN,ReLU,1x1,Sigmoid — second BN uses fused
    # GEMM stats; the sigmoid itself is fused into the combine kernel.
    s = bn_relu(x_s)
    s, st = conv2d(s, p["sig_conv1"])
    s = bn_relu_apply(s, *st)
    s, _ = conv2d(s, p["sig_conv2"])
    x = attn_combine(s, x_t)
    x = seq(p["last"], x)
    return x


def make_attention(key, block_num, class_num=100):
    keys = iter(jax.random.split(key, 64))
    p = {"pre_conv": conv_params(next(keys), 64, 3, 3, 3)}

    def make_stage(cin, cout, num, variant):
        return {"down": make_preact_unit(next(keys), cin, cout, 2),
                "blocks": [make_attention_module(next(keys), cout, variant)
                           for _ in range(num)]}

    p["stage1"] = make_stage(64, 256, block_num[0], 1)
    p["stage2"] = make_stage(256, 512, block_num[1], 2)
    p["stage3"] = make_stage(512, 1024, block_num[2], 3)
    p["stage4"] = [make_preact_unit(next(keys), 1024, 2048, 2),
                   make_preact_unit(next(keys), 2048, 2048, 1),
                   make_preact_unit(next(keys), 2048, 2048, 1)]
    p["linear"] = linear_params(next(keys), class_num, 2048)
    return p


def attention_fwd(p, x_nhwc):
    x = x_nhwc.astype(jnp.bfloat16)
    x, st = conv2d(x, p["pre_conv"], stride=1, padding=1)
    x = bn_relu_apply(x, *st)
    for stage in (p["stage1"], p["stage2"], p["stage3"]):
        x = preact_unit_fwd(stage["down"], x)
        for blk in stage["blocks"]:
            x = attention_module_fwd(blk, x)
    for u in p["stage4"]:
        x = preact_unit_fwd(u, x)
    x = jnp.mean(x.astype(jnp.float32), axis=(1, 2))   # AdaptiveAvgPool2d(1) + flatten
    logits, _ = matmul_bias_stats(x, p["linear"]["wmat"], p["linear"]["bias"],
                                  out_dtype=jnp.float32)  # DelayExpansionLinear
    return logits


# ----------------------------------------------------------------------------
if __name__ == "__main__":
    key = jax.random.PRNGKey(0)
    pkey, xkey = jax.random.split(key)

    params = make_attention(pkey, block_num=[1, 1, 1], class_num=100)

    # PyTorch-style NCHW input (B=2, C=3, H=W=8)
    x_nchw = jax.random.normal(xkey, (2, 3, 8, 8), dtype=jnp.float32)
    x_nhwc = jnp.transpose(x_nchw, (0, 2, 3, 1))       # layout: NHWC inside kernels

    out = attention_fwd(params, x_nhwc)
    out = jax.block_until_ready(out)
    assert out.shape == (2, 100) and out.dtype == jnp.float32
    print("KERNEL_OK")
</pallas_src>

<mosaic_0001>
module attributes {stable_mosaic.version = 11 : i64} {
  func.func @_matmul_bias_stats_kernel(%arg0: i32, %arg1: memref<128x27xbf16, #tpu.memory_space<vmem>>, %arg2: memref<27x64xbf16, #tpu.memory_space<vmem>>, %arg3: memref<1x64xf32, #tpu.memory_space<vmem>>, %arg4: memref<128x64xbf16, #tpu.memory_space<vmem>>, %arg5: memref<1x2x64xf32, #tpu.memory_space<vmem>>) attributes {dimension_semantics = [#tpu.dimension_semantics<parallel>], iteration_bounds = array<i64: 1>, scalar_prefetch = 0 : i64, scratch_operands = 0 : i64, tpu.core_type = #tpu.core_type<tc>, window_params = [{transform_indices = @transform_0, window_bounds = array<i64: 128, 27>}, {pipeline_mode = #tpu.pipeline_mode<synchronous>, transform_indices = @transform_1, window_bounds = array<i64: 27, 64>}, {pipeline_mode = #tpu.pipeline_mode<synchronous>, transform_indices = @transform_2, window_bounds = array<i64: 1, 64>}, {transform_indices = @transform_3, window_bounds = array<i64: 128, 64>}, {transform_indices = @transform_4, window_bounds = array<i64: 1, 2, 64>}]} {
    %c0 = arith.constant 0 : index
    %c0_0 = arith.constant 0 : index
    %0 = vector.load %arg1[%c0, %c0_0] : memref<128x27xbf16, #tpu.memory_space<vmem>>, vector<128x27xbf16>
    %c0_1 = arith.constant 0 : index
    %c0_2 = arith.constant 0 : index
    %1 = vector.load %arg2[%c0_1, %c0_2] : memref<27x64xbf16, #tpu.memory_space<vmem>>, vector<27x64xbf16>
    %cst = arith.constant dense<0.000000e+00> : vector<128x64xf32>
    %2 = tpu.matmul %0, %1, %cst {dimension_numbers = #tpu.dot_dimension_numbers<[1], [0], [0], [1], [0, 0, 1, 1], [], []>} : vector<128x27xbf16>, vector<27x64xbf16>, vector<128x64xf32> -> vector<128x64xf32>
    %c0_3 = arith.constant 0 : index
    %c0_4 = arith.constant 0 : index
    %3 = vector.load %arg3[%c0_3, %c0_4] : memref<1x64xf32, #tpu.memory_space<vmem>>, vector<1x64xf32>
    %4 = vector.broadcast %3 : vector<1x64xf32> to vector<128x64xf32>
    %5 = arith.addf %2, %4 : vector<128x64xf32>
    %6 = arith.truncf %5 : vector<128x64xf32> to vector<128x64xbf16>
    %c0_5 = arith.constant 0 : index
    %c0_6 = arith.constant 0 : index
    %7 = vector.load %arg4[%c0_5, %c0_6] : memref<128x64xbf16, #tpu.memory_space<vmem>>, vector<128x64xbf16>
    tpu.vector_store %arg4[%c0_5, %c0_6], %6 {strides = array<i32>} : memref<128x64xbf16, #tpu.memory_space<vmem>>, vector<128x64xbf16>,
    %cst_7 = arith.constant dense<0.000000e+00> : vector<64xf32>
    %8 = vector.multi_reduction <add>, %5, %cst_7 [0] : vector<128x64xf32> to vector<64xf32>
    %9 = vector.shape_cast %8 : vector<64xf32> to vector<1x64xf32>
    %10 = arith.mulf %5, %5 : vector<128x64xf32>
    %cst_8 = arith.constant dense<0.000000e+00> : vector<64xf32>
    %11 = vector.multi_reduction <add>, %10, %cst_8 [0] : vector<128x64xf32> to vector<64xf32>
    %12 = vector.shape_cast %11 : vector<64xf32> to vector<1x64xf32>
    %13 = tpu.concatenate %9, %12 in 0 : vector<1x64xf32>, vector<1x64xf32> -> vector<2x64xf32>
    %14 = vector.shape_cast %13 : vector<2x64xf32> to vector<1x2x64xf32>
    %c0_9 = arith.constant 0 : index
    %c0_10 = arith.constant 0 : index
    %c0_11 = arith.constant 0 : index
    %15 = vector.load %arg5[%c0_9, %c0_10, %c0_11] : memref<1x2x64xf32, #tpu.memory_space<vmem>>, vector<1x2x64xf32>
    tpu.vector_store %arg5[%c0_9, %c0_10, %c0_11], %14 {strides = array<i32>} : memref<1x2x64xf32, #tpu.memory_space<vmem>>, vector<1x2x64xf32>,
    return
  }
  func.func @transform_0(%arg0: i32) -> (i32, i32) {
    %c0_i32 = arith.constant 0 : i32
    %c0_i32_0 = arith.constant 0 : i32
    return %arg0, %c0_i32 : i32, i32
  }
  func.func @transform_1(%arg0: i32) -> (i32, i32) {
    %c0_i32 = arith.constant 0 : i32
    %c0_i32_0 = arith.constant 0 : i32
    %c0_i32_1 = arith.constant 0 : i32
    return %c0_i32, %c0_i32_0 : i32, i32
  }
  func.func @transform_2(%arg0: i32) -> (i32, i32) {
    %c0_i32 = arith.constant 0 : i32
    %c0_i32_0 = arith.constant 0 : i32
    %c0_i32_1 = arith.constant 0 : i32
    return %c0_i32, %c0_i32_0 : i32, i32
  }
  func.func @transform_3(%arg0: i32) -> (i32, i32) {
    %c0_i32 = arith.constant 0 : i32
    %c0_i32_0 = arith.constant 0 : i32
    return %arg0, %c0_i32 : i32, i32
  }
  func.func @transform_4(%arg0: i32) -> (i32, i32, i32) {
    %c0_i32 = arith.constant 0 : i32
    %c0_i32_0 = arith.constant 0 : i32
    %c0_i32_1 = arith.constant 0 : i32
    return %arg0, %c0_i32, %c0_i32_0 : i32, i32, i32
  }
}

</mosaic_0001>

<llo_original>
// kernel: tpu_custom_call.1
$region0: #{tpu_custom_call.1}
  #allocation0 [shape = 'u32[]', space=smem, size = 0x4, offset = 0x4, fixed_abs, tag = 'smem constant byte address 0x4 - core index']
  #allocation1 [shape = 'u32[144,128]{1,0:T(1,128)}', space=vmem, size = 0x12000, scoped, tag = 'internal scratch']
  %s0 = inlined_call_operand.vmem [shape: bf16[128,27], index: 0, kind: input, shape index: {}]
  %s1 = inlined_call_operand.vmem [shape: bf16[27,64], index: 1, kind: input, shape index: {}]
  %s2 = inlined_call_operand.vmem [shape: f32[1,64], index: 2, kind: input, shape index: {}]
  %s3 = inlined_call_operand.vmem [shape: bf16[128,64], index: 3, kind: output, shape index: {0}]
  %s4 = inlined_call_operand.hbm [shape: f32[1,2,64], index: 4, kind: output, shape index: {1}]
  %5 = xla_tuple %s3, %s4
  %s6 = sld [smem:[#allocation0]]
  $region30: #{tpu_custom_call.1} parent=0
    _
  %s8 = ssub.s32 1, %s6
  %s9 = scalar_select 0, %s8, %s6
  $region1: #{tpu_custom_call.1} parent=0
    #allocation2 [shape = 'u8[1024]{0}', space=vmem, size = 0x400, scoped, tag = 'output window, operand 1, single buffered']
    #allocation3 [shape = 's32[1]{0}', space=sflag, size = 0x4, scoped, tag = 'scoped memory for tpu_custom_call.1']
    %10 = vsyncpa [#allocation3], 0
    // Predicated region
    $region2: #{tpu_custom_call.1} parent=1 // pred_check
      _
    $region3: #{tpu_custom_call.1} parent=1 // pred_check_branch
      %12 = sbr.rel (0) target = $region5
    $region4: #{tpu_custom_call.1} parent=1 // pred_region
      _
    $region5: #{tpu_custom_call.1} parent=1 // pred_fallthru
      _
    // Predicated region
    $region6: #{tpu_custom_call.1} parent=1 // pred_check
      _
    $region7: #{tpu_custom_call.1} parent=1 // pred_check_branch
      %14 = sbr.rel (0) target = $region9
    $region8: #{tpu_custom_call.1} parent=1 // pred_region
      _
    $region9: #{tpu_custom_call.1} parent=1 // pred_fallthru
      _
    // Predicated region
    $region10: #{tpu_custom_call.1} parent=1 // pred_check
      _
    $region11: #{tpu_custom_call.1} parent=1 // pred_check_branch
      %16 = sbr.rel (0) target = $region13
    $region12: #{tpu_custom_call.1} parent=1 // pred_region
      _
    $region13: #{tpu_custom_call.1} parent=1 // pred_fallthru
      _
    %v18 = vld [vmem:[%s0] sm:$0xf]
    %v19 = vld [vmem:[%s0 + $0x4] sm:$0xf]
    %v20 = vld [vmem:[%s0 + $0x8] sm:$0xf]
    %v21 = vld [vmem:[%s0 + $0xc] sm:$0xf]
    %v22 = vld [vmem:[%s0 + $0x10] sm:$0xf]
    %v23 = vld [vmem:[%s0 + $0x14] sm:$0xf]
    %v24 = vld [vmem:[%s0 + $0x18] sm:$0xf]
    %v25 = vld [vmem:[%s0 + $0x1c] sm:$0xf]
    %v26 = vld [vmem:[%s0 + $0x20] sm:$0xf]
    %v27 = vld [vmem:[%s0 + $0x24] sm:$0xf]
    %v28 = vld [vmem:[%s0 + $0x28] sm:$0xf]
    %v29 = vld [vmem:[%s0 + $0x2c] sm:$0xf]
    %v30 = vld [vmem:[%s0 + $0x30] sm:$0xf]
    %v31 = vld [vmem:[%s0 + $0x34] sm:$0xf]
    %v32 = vld [vmem:[%s0 + $0x38] sm:$0xf]
    %v33 = vld [vmem:[%s0 + $0x3c] sm:$0xf]
    %v34 = vld [vmem:[%s1] sm:$0xf]
    %v35 = vld [vmem:[%s1 + $0x4] sm:$0xf]
    %v36 = vld [vmem:[%s1 + $0x8] sm:$0xf]
    %v37 = vld [vmem:[%s1 + $0xc] sm:$0x3]
    %v38 = vld [vmem:[%s2] sm:$0x1]
    %v40 = vlaneseq
    %v41 = vshrl.u32 %v40, 7
    %v42 = vsub.s32 0, %v41
    %v43 = vrot.slane %v38, %v42
    %v61 = vunpack.c.l.b16 %v18
    %v62 = vunpack.c.l.b16 %v19
    %v63 = vunpack.c.l.b16 %v20
    %v64 = vunpack.c.l.b16 %v21
    %v65 = vunpack.c.l.b16 %v22
    %v66 = vunpack.c.l.b16 %v23
    %v67 = vunpack.c.l.b16 %v24
    %v68 = vunpack.c.l.b16 %v25
    %v69 = vunpack.c.l.b16 %v26
    %v70 = vunpack.c.l.b16 %v27
    %v71 = vunpack.c.l.b16 %v28
    %v72 = vunpack.c.l.b16 %v29
    %v73 = vunpack.c.l.b16 %v30
    %v74 = vunpack.c.l.b16 %v31
    %v75 = vunpack.c.l.b16 %v32
    %v76 = vunpack.c.l.b16 %v33
    %v77 = vpack.c.b16 %v62, %v61
    %v78 = vpack.c.b16 %v64, %v63
    %v79 = vpack.c.b16 %v66, %v65
    %v80 = vpack.c.b16 %v68, %v67
    %v81 = vpack.c.b16 %v70, %v69
    %v82 = vpack.c.b16 %v72, %v71
    %v83 = vpack.c.b16 %v74, %v73
    %v84 = vpack.c.b16 %v76, %v75
    %v89 = vunpack.c.l.b16 %v34
    %v90 = vunpack.c.l.b16 %v35
    %v91 = vunpack.c.l.b16 %v36
    %v92 = vunpack.c.l.b16 %v37
    %v93 = vpack.c.b16 %v90, %v89
    %v94 = vpack.c.b16 %v92, %v91
    %vm96 = vcmask 220160
    %v98 = vsel %vm96, %v77, 0
    %v101 = vsel %vm96, %v78, 0
    %v104 = vsel %vm96, %v79, 0
    %v107 = vsel %vm96, %v80, 0
    %v110 = vsel %vm96, %v81, 0
    %v113 = vsel %vm96, %v82, 0
    %v116 = vsel %vm96, %v83, 0
    %v119 = vsel %vm96, %v84, 0
    %vm121 = vcmask 1044480
    %vm122 = vcmask 1045504
    %v123 = vsel %vm121, 4294967295, 65535
    %v124 = vsel %vm122, %v123, 0
    %v126 = vand.u32 %v94, %v124
    %128 = vmatprep.subr.bf16.mxu0 0
    %129 = vmatpush1.bf16.msra.mxu0 0
    %130 = vmatprep.subr.bf16.mxu0 0
    %131 = vmatpush1.bf16.msra.mxu0 0
    %132 = vmatprep.subr.bf16.mxu0 0
    %133 = vmatpush1.bf16.msra.mxu0 0
    %134 = vmatprep.subr.bf16.mxu0 0
    %135 = vmatpush1.bf16.msra.mxu0 0
    %136 = vmatprep.subr.bf16.mxu0 0
    %137 = vmatpush1.bf16.msra.mxu0 0
    %138 = vmatprep.subr.bf16.mxu0 0
    %139 = vmatpush1.bf16.msra.mxu0 0
    %140 = vmatprep.subr.bf16.mxu0 0
    %141 = vmatpush1.bf16.msra.mxu0 %v126
    %142 = vmatprep.subr.bf16.mxu0 0
    %143 = vmatpush1.bf16.msra.mxu0 %v93
    %144 = vmatprep.subr.bf16.mxu0 0
    %145 = vmatpush2.bf16.msra.mxu0 0
    %146 = vmatprep.subr.bf16.mxu0 0
    %147 = vmatpush2.bf16.msra.mxu0 0
    %148 = vmatprep.subr.bf16.mxu0 0
    %149 = vmatpush2.bf16.msra.mxu0 0
    %150 = vmatprep.subr.bf16.mxu0 0
    %151 = vmatpush2.bf16.msra.mxu0 0
    %152 = vmatprep.subr.bf16.mxu0 0
    %153 = vmatpush2.bf16.msra.mxu0 0
    %154 = vmatprep.subr.bf16.mxu0 0
    %155 = vmatpush2.bf16.msra.mxu0 0
    %156 = vmatprep.subr.bf16.mxu0 0
    %157 = vmatpush2.bf16.msra.mxu0 0
    %158 = vmatprep.subr.bf16.mxu0 0
    %159 = vmatpush2.bf16.msra.mxu0 0
    %160 = vmatprep.mubr.bf16.mxu0 0
    %161 = vmatmul.mubr.bf16.gmra.mxu0 %v98
    %v162 = vpop.f32.mrf.mxu0
    %v163 = vadd.f32 %v43, %v162
    %v164 = vpop.f32.mrf.mxu0
    %v165 = vpop.f32.mrf.mxu0
    %v166 = vadd.f32 %v43, %v165
    %v167 = vpop.f32.mrf.mxu0
    %168 = vmatprep.mubr.bf16.mxu0 0
    %169 = vmatmul.mubr.bf16.gmra.mxu0 %v101
    %v170 = vpop.f32.mrf.mxu0
    %v171 = vadd.f32 %v43, %v170
    %v172 = vpop.f32.mrf.mxu0
    %v173 = vpop.f32.mrf.mxu0
    %v174 = vadd.f32 %v43, %v173
    %v175 = vpop.f32.mrf.mxu0
    %176 = vmatprep.mubr.bf16.mxu0 0
    %177 = vmatmul.mubr.bf16.gmra.mxu0 %v104
    %v178 = vpop.f32.mrf.mxu0
    %v179 = vadd.f32 %v43, %v178
    %v180 = vpop.f32.mrf.mxu0
    %v181 = vpop.f32.mrf.mxu0
    %v182 = vadd.f32 %v43, %v181
    %v183 = vpop.f32.mrf.mxu0
    %184 = vmatprep.mubr.bf16.mxu0 0
    %185 = vmatmul.mubr.bf16.gmra.mxu0 %v107
    %v186 = vpop.f32.mrf.mxu0
    %v187 = vadd.f32 %v43, %v186
    %v188 = vpop.f32.mrf.mxu0
    %v189 = vpop.f32.mrf.mxu0
    %v190 = vadd.f32 %v43, %v189
    %v191 = vpop.f32.mrf.mxu0
    %192 = vmatprep.mubr.bf16.mxu0 0
    %193 = vmatmul.mubr.bf16.gmra.mxu0 %v110
    %v194 = vpop.f32.mrf.mxu0
    %v195 = vadd.f32 %v43, %v194
    %v196 = vpop.f32.mrf.mxu0
    %v197 = vpop.f32.mrf.mxu0
    %v198 = vadd.f32 %v43, %v197
    %v199 = vpop.f32.mrf.mxu0
    %200 = vmatprep.mubr.bf16.mxu0 0
    %201 = vmatmul.mubr.bf16.gmra.mxu0 %v113
    %v202 = vpop.f32.mrf.mxu0
    %v203 = vadd.f32 %v43, %v202
    %v204 = vpop.f32.mrf.mxu0
    %v205 = vpop.f32.mrf.mxu0
    %v206 = vadd.f32 %v43, %v205
    %v207 = vpop.f32.mrf.mxu0
    %208 = vmatprep.mubr.bf16.mxu0 0
    %209 = vmatmul.mubr.bf16.gmra.mxu0 %v116
    %v210 = vpop.f32.mrf.mxu0
    %v211 = vadd.f32 %v43, %v210
    %v212 = vpop.f32.mrf.mxu0
    %v213 = vpop.f32.mrf.mxu0
    %v214 = vadd.f32 %v43, %v213
    %v215 = vpop.f32.mrf.mxu0
    %216 = vmatprep.mubr.bf16.mxu0 0
    %217 = vmatmul.mubr.bf16.gmra.mxu0 %v119
    %v218 = vpop.f32.mrf.mxu0
    %v219 = vadd.f32 %v43, %v218
    %v220 = vpop.f32.mrf.mxu0
    %v221 = vpop.f32.mrf.mxu0
    %v222 = vadd.f32 %v43, %v221
    %v223 = vpop.f32.mrf.mxu0
    %224 = vdwg.mxu0
    %v225 = vpack.c.bf16 %v166, %v163
    %v226 = vpack.c.bf16 %v174, %v171
    %v227 = vpack.c.bf16 %v182, %v179
    %v228 = vpack.c.bf16 %v190, %v187
    %v229 = vpack.c.bf16 %v198, %v195
    %v230 = vpack.c.bf16 %v206, %v203
    %v231 = vpack.c.bf16 %v214, %v211
    %v232 = vpack.c.bf16 %v222, %v219
    %v241 = vunpack.c.l.b16 %v225
    %v242 = vunpack.c.h.b16 %v225
    %v243 = vunpack.c.l.b16 %v226
    %v244 = vunpack.c.h.b16 %v226
    %v245 = vunpack.c.l.b16 %v227
    %v246 = vunpack.c.h.b16 %v227
    %v247 = vunpack.c.l.b16 %v228
    %v248 = vunpack.c.h.b16 %v228
    %v249 = vunpack.c.l.b16 %v229
    %v250 = vunpack.c.h.b16 %v229
    %v251 = vunpack.c.l.b16 %v230
    %v252 = vunpack.c.h.b16 %v230
    %v253 = vunpack.c.l.b16 %v231
    %v254 = vunpack.c.h.b16 %v231
    %v255 = vunpack.c.l.b16 %v232
    %v256 = vunpack.c.h.b16 %v232
    %v257 = vpack.c.b16 %v241, %v241
    %v258 = vpack.c.b16 %v242, %v242
    %v259 = vpack.c.b16 %v243, %v243
    %v260 = vpack.c.b16 %v244, %v244
    %v261 = vpack.c.b16 %v245, %v245
    %v262 = vpack.c.b16 %v246, %v246
    %v263 = vpack.c.b16 %v247, %v247
    %v264 = vpack.c.b16 %v248, %v248
    %v265 = vpack.c.b16 %v249, %v249
    %v266 = vpack.c.b16 %v250, %v250
    %v267 = vpack.c.b16 %v251, %v251
    %v268 = vpack.c.b16 %v252, %v252
    %v269 = vpack.c.b16 %v253, %v253
    %v270 = vpack.c.b16 %v254, %v254
    %v271 = vpack.c.b16 %v255, %v255
    %v272 = vpack.c.b16 %v256, %v256
    %vm289 = vcmask 519168
    %290 = vst.msk [vmem:[%s3] sm:$0xf] %vm289, %v257
    %291 = vst.msk [vmem:[%s3 + $0x4] sm:$0xf] %vm289, %v258
    %292 = vst.msk [vmem:[%s3 + $0x8] sm:$0xf] %vm289, %v259
    %293 = vst.msk [vmem:[%s3 + $0xc] sm:$0xf] %vm289, %v260
    %294 = vst.msk [vmem:[%s3 + $0x10] sm:$0xf] %vm289, %v261
    %295 = vst.msk [vmem:[%s3 + $0x14] sm:$0xf] %vm289, %v262
    %296 = vst.msk [vmem:[%s3 + $0x18] sm:$0xf] %vm289, %v263
    %297 = vst.msk [vmem:[%s3 + $0x1c] sm:$0xf] %vm289, %v264
    %298 = vst.msk [vmem:[%s3 + $0x20] sm:$0xf] %vm289, %v265
    %299 = vst.msk [vmem:[%s3 + $0x24] sm:$0xf] %vm289, %v266
    %300 = vst.msk [vmem:[%s3 + $0x28] sm:$0xf] %vm289, %v267
    %301 = vst.msk [vmem:[%s3 + $0x2c] sm:$0xf] %vm289, %v268
    %302 = vst.msk [vmem:[%s3 + $0x30] sm:$0xf] %vm289, %v269
    %303 = vst.msk [vmem:[%s3 + $0x34] sm:$0xf] %vm289, %v270
    %304 = vst.msk [vmem:[%s3 + $0x38] sm:$0xf] %vm289, %v271
    %305 = vst.msk [vmem:[%s3 + $0x3c] sm:$0xf] %vm289, %v272
    %vm306 = vcmask 523264
    %v307 = vsel %vm306, %v163, 0.0
    %v308 = vsel %vm306, %v166, 0.0
    %v309 = vadd.f32 %v307, %v308
    %v310 = vsel %vm306, %v171, 0.0
    %v311 = vadd.f32 %v309, %v310
    %v312 = vsel %vm306, %v174, 0.0
    %v313 = vadd.f32 %v311, %v312
    %v314 = vsel %vm306, %v179, 0.0
    %v315 = vadd.f32 %v313, %v314
    %v316 = vsel %vm306, %v182, 0.0
    %v317 = vadd.f32 %v315, %v316
    %v318 = vsel %vm306, %v187, 0.0
    %v319 = vadd.f32 %v317, %v318
    %v320 = vsel %vm306, %v190, 0.0
    %v321 = vadd.f32 %v319, %v320
    %v322 = vsel %vm306, %v195, 0.0
    %v323 = vadd.f32 %v321, %v322
    %v324 = vsel %vm306, %v198, 0.0
    %v325 = vadd.f32 %v323, %v324
    %v326 = vsel %vm306, %v203, 0.0
    %v327 = vadd.f32 %v325, %v326
    %v328 = vsel %vm306, %v206, 0.0
    %v329 = vadd.f32 %v327, %v328
    %v330 = vsel %vm306, %v211, 0.0
    %v331 = vadd.f32 %v329, %v330
    %v332 = vsel %vm306, %v214, 0.0
    %v333 = vadd.f32 %v331, %v332
    %v334 = vsel %vm306, %v219, 0.0
    %v335 = vadd.f32 %v333, %v334
    %v336 = vsel %vm306, %v222, 0.0
    %v337 = vadd.f32 %v335, %v336
    %v338 = vrot.slane %v337, 4
    %v339 = vadd.f32 %v337, %v338
    %v340 = vrot.slane %v339, 2
    %v341 = vadd.f32 %v339, %v340
    %v342 = vrot.slane %v341, 1
    %v343 = vadd.f32 %v341, %v342
    %v344 = vmul.f32 %v163, %v163
    %v345 = vmul.f32 %v166, %v166
    %v346 = vmul.f32 %v171, %v171
    %v347 = vmul.f32 %v174, %v174
    %v348 = vmul.f32 %v179, %v179
    %v349 = vmul.f32 %v182, %v182
    %v350 = vmul.f32 %v187, %v187
    %v351 = vmul.f32 %v190, %v190
    %v352 = vmul.f32 %v195, %v195
    %v353 = vmul.f32 %v198, %v198
    %v354 = vmul.f32 %v203, %v203
    %v355 = vmul.f32 %v206, %v206
    %v356 = vmul.f32 %v211, %v211
    %v357 = vmul.f32 %v214, %v214
    %v358 = vmul.f32 %v219, %v219
    %v359 = vmul.f32 %v222, %v222
    %v360 = vsel %vm306, %v344, 0.0
    %v361 = vsel %vm306, %v345, 0.0
    %v362 = vadd.f32 %v360, %v361
    %v363 = vsel %vm306, %v346, 0.0
    %v364 = vadd.f32 %v362, %v363
    %v365 = vsel %vm306, %v347, 0.0
    %v366 = vadd.f32 %v364, %v365
    %v367 = vsel %vm306, %v348, 0.0
    %v368 = vadd.f32 %v366, %v367
    %v369 = vsel %vm306, %v349, 0.0
    %v370 = vadd.f32 %v368, %v369
    %v371 = vsel %vm306, %v350, 0.0
    %v372 = vadd.f32 %v370, %v371
    %v373 = vsel %vm306, %v351, 0.0
    %v374 = vadd.f32 %v372, %v373
    %v375 = vsel %vm306, %v352, 0.0
    %v376 = vadd.f32 %v374, %v375
    %v377 = vsel %vm306, %v353, 0.0
    %v378 = vadd.f32 %v376, %v377
    %v379 = vsel %vm306, %v354, 0.0
    %v380 = vadd.f32 %v378, %v379
    %v381 = vsel %vm306, %v355, 0.0
    %v382 = vadd.f32 %v380, %v381
    %v383 = vsel %vm306, %v356, 0.0
    %v384 = vadd.f32 %v382, %v383
    %v385 = vsel %vm306, %v357, 0.0
    %v386 = vadd.f32 %v384, %v385
    %v387 = vsel %vm306, %v358, 0.0
    %v388 = vadd.f32 %v386, %v387
    %v389 = vsel %vm306, %v359, 0.0
    %v390 = vadd.f32 %v388, %v389
    %v391 = vrot.slane %v390, 4
    %v392 = vadd.f32 %v390, %v391
    %v393 = vrot.slane %v392, 2
    %v394 = vadd.f32 %v392, %v393
    %v395 = vrot.slane %v394, 1
    %v396 = vadd.f32 %v394, %v395
    %vm397 = vcmask 1040384
    %v398 = vsel %vm397, %v343, %v396
    %vm399 = vcmask 517120
    %400 = vst.msk [vmem:[#allocation2] sm:$0x3] %vm399, %v398
    // Predicated region
    $region14: #{tpu_custom_call.1} parent=1 // pred_check
      _
    $region15: #{tpu_custom_call.1} parent=1 // pred_check_branch
      %402 = sbr.rel (0) target = $region17
    $region16: #{tpu_custom_call.1} parent=1 // pred_region
      _
    $region17: #{tpu_custom_call.1} parent=1 // pred_fallthru
      _
    // Predicated region
    $region18: #{tpu_custom_call.1} parent=1 // pred_check
      _
    $region19: #{tpu_custom_call.1} parent=1 // pred_check_branch
      %404 = sbr.rel (0) target = $region21
    $region20: #{tpu_custom_call.1} parent=1 // pred_region
      %s406 = ssub.s32 32, 32
      %407 = vsyncadd [#allocation3], %s406
      %s409 = sshll.u32 [#allocation2], 4
      %s410 = int_to_ptr.vmem [resolvable:$true] %s409
      %412 = dma.vmem_to_hbm [thread:$0]  %s410, 32, %s4, [#allocation3]
    $region21: #{tpu_custom_call.1} parent=1 // pred_fallthru
      _
    // Predicated region
    $region22: #{tpu_custom_call.1} parent=1 // pred_check
      _
    $region23: #{tpu_custom_call.1} parent=1 // pred_check_branch
      %414 = sbr.rel (0) target = $region25
    $region24: #{tpu_custom_call.1} parent=1 // pred_region
      _
    $region25: #{tpu_custom_call.1} parent=1 // pred_fallthru
      _
    // Predicated region
    $region26: #{tpu_custom_call.1} parent=1 // pred_check
      _
    $region27: #{tpu_custom_call.1} parent=1 // pred_check_branch
      %416 = sbr.rel (0) target = $region29
    $region28: #{tpu_custom_call.1} parent=1 // pred_region
      %417 = dma.done [#allocation3], 32
    $region29: #{tpu_custom_call.1} parent=1 // pred_fallthru
      _
    %418 = vsyncpa [#allocation3], 1

</llo_original>
